<compile_context>
chip_gen: v5e
topology: v5e:2x2
jax: 0.10.0
libtpu: 0.0.40
codegen_flags: <defaults>
</compile_context>

<pallas_src>
import functools
import math

import jax
import jax.numpy as jnp
from jax.experimental import pallas as pl
from jax.experimental.pallas import tpu as pltpu


_LANE = 128            # feature dims padded (once, in prepare) to lane width
_SUBLANE = 8           # batch-tile granularity
_TILE_B_MAX = 512      # fat tiles amortize the ~0.35us/step overhead
_TILE_B_MIN = 128      # but keep >=4 grid steps when the batch allows
_TILE_H_MAX = 1024     # hidden-dim tile for the k-tiled path
_VMEM_HEADROOM = 8 << 20   # leave room for Mosaic internal scratch


def _round_up(x, m):
    return (x + m - 1) // m * m


def _vmem_capacity_bytes():
    try:
        return int(pltpu.get_tpu_info().vmem_capacity_bytes)
    except Exception:
        return 64 << 20  # conservative default (v7x per-TensorCore VMEM)


def _apply_activation(h, activation):
    # f32 math (v5e has no bf16 VPU/EUP); mirrors the PyTorch branches.
    if activation == "relu":
        return jnp.maximum(h, 0.0)
    if activation == "leaky_relu":
        return jnp.where(h >= 0.0, h, 0.01 * h)  # torch default negative_slope
    if activation == "gelu":
        # Exact erf formulation (torch.nn.functional.gelu default).
        return 0.5 * h * (1.0 + jax.lax.erf(h * (1.0 / math.sqrt(2.0))))
    return h  # identity fallthrough, as in the PyTorch module


# --------------------------------------------------------------------------
# One-time parameter preparation (hoisted out of the per-call path).
# --------------------------------------------------------------------------
def prepare_mlp_params(w1, b1, w2, b2):
    """Pad d_hid/d_out to the 128-lane width and cast weights to bf16 ONCE."""
    w1 = jnp.asarray(w1)
    w2 = jnp.asarray(w2)
    d_in, d_hid = w1.shape
    d_hid2, d_out = w2.shape
    assert d_hid == d_hid2, "fc1 output dim must match fc2 input dim"
    d_hid_p = _round_up(d_hid, _LANE)
    d_out_p = _round_up(d_out, _LANE)
    w1_p = jnp.zeros((d_in, d_hid_p), jnp.bfloat16).at[:, :d_hid].set(
        w1.astype(jnp.bfloat16))
    w2_p = jnp.zeros((d_hid_p, d_out_p), jnp.bfloat16).at[:d_hid, :d_out].set(
        w2.astype(jnp.bfloat16))
    b1_p = jnp.zeros((1, d_hid_p), jnp.float32).at[0, :d_hid].set(
        jnp.asarray(b1, jnp.float32).reshape(-1))
    b2_p = jnp.zeros((1, d_out_p), jnp.float32).at[0, :d_out].set(
        jnp.asarray(b2, jnp.float32).reshape(-1))
    return {"w1": w1_p, "b1": b1_p, "w2": w2_p, "b2": b2_p,
            "d_in": d_in, "d_hid": d_hid, "d_out": d_out}


# --------------------------------------------------------------------------
# Kernels.
# --------------------------------------------------------------------------
def _mlp_kernel_resident(x_ref, w1_ref, b1_ref, w2_ref, b2_ref, o_ref, *,
                         activation):
    # fc1: cast x to bf16 in-kernel (hidden under the MXU), f32 accumulation.
    h = jnp.dot(x_ref[...].astype(jnp.bfloat16), w1_ref[...],
                preferred_element_type=jnp.float32)
    h = _apply_activation(h + b1_ref[...], activation)
    # fc2: back to bf16 so the second matmul also runs at bf16 MXU rate.
    out = jnp.dot(h.astype(jnp.bfloat16), w2_ref[...],
                  preferred_element_type=jnp.float32)
    o_ref[...] = (out + b2_ref[...]).astype(o_ref.dtype)


def _mlp_kernel_ktiled(x_ref, w1_ref, b1_ref, w2_ref, b2_ref, o_ref, acc_ref,
                       *, activation):
    # Hidden dim tiled along the (innermost, "arbitrary") grid axis k.
    k = pl.program_id(1)

    @pl.when(k == 0)
    def _():
        acc_ref[...] = jnp.zeros_like(acc_ref)

    h = jnp.dot(x_ref[...].astype(jnp.bfloat16), w1_ref[...],
                preferred_element_type=jnp.float32)
    h = _apply_activation(h + b1_ref[...], activation)
    acc_ref[...] += jnp.dot(h.astype(jnp.bfloat16), w2_ref[...],
                            preferred_element_type=jnp.float32)

    @pl.when(k == pl.num_programs(1) - 1)
    def _():
        o_ref[...] = (acc_ref[...] + b2_ref[...]).astype(o_ref.dtype)


# --------------------------------------------------------------------------
# Tiling / VMEM policy.
# --------------------------------------------------------------------------
def _pick_tile_b(batch):
    if batch <= _TILE_B_MIN:
        return max(_SUBLANE, _round_up(batch, _SUBLANE))
    tile_b = _TILE_B_MAX
    # Prefer >=4 grid steps (DMA pipelining + v7x megacore) when batch allows,
    # but keep tiles fat enough to amortize per-step overhead (v5e especially).
    while tile_b > _TILE_B_MIN and pl.cdiv(batch, tile_b) < 4:
        tile_b //= 2
    return tile_b


def _pick_tile_h(d_hid_p):
    tile = min(d_hid_p, _TILE_H_MAX)
    tile -= tile % _LANE
    while d_hid_p % tile:
        tile -= _LANE
    return tile


def _clamp_vmem(budget):
    cap = max(_vmem_capacity_bytes() - _VMEM_HEADROOM, 16 << 20)
    return int(min(max(budget, 16 << 20), cap))


def _vmem_limit_resident(tile_b, d_in, d_hid_p, d_out_p, x_bytes, out_bytes,
                         weight_buffers):
    budget = (
        2 * tile_b * d_in * x_bytes                                # x tiles (double buffered)
        + 2 * tile_b * d_out_p * out_bytes                         # out tiles (double buffered)
        + weight_buffers * (d_in * d_hid_p + d_hid_p * d_out_p) * 2   # bf16 weights
        + weight_buffers * (d_hid_p + d_out_p) * 4                    # f32 biases
        + tile_b * (2 * d_in + 6 * d_hid_p + 4 * d_out_p)          # in-kernel temps
        + (4 << 20)                                                # slack
    )
    return _clamp_vmem(budget)


def _vmem_limit_ktiled(tile_b, tile_h, d_in, d_out_p, x_bytes, out_bytes):
    budget = (
        2 * tile_b * d_in * x_bytes
        + 2 * d_in * tile_h * 2 + 2 * tile_h * 4                   # w1/b1 tiles
        + 2 * tile_h * d_out_p * 2 + d_out_p * 4                   # w2 tiles + b2
        + 2 * tile_b * d_out_p * out_bytes
        + tile_b * d_out_p * 4                                     # f32 accumulator
        + tile_b * (2 * d_in + 6 * tile_h + 4 * d_out_p)           # in-kernel temps
        + (4 << 20)
    )
    return _clamp_vmem(budget)


# --------------------------------------------------------------------------
# Forward.
# --------------------------------------------------------------------------
def mlp_forward(x, params, activation="relu", *, out_dtype=None,
                tile_b=None, tile_h=None, force_ktiled=False):
    """x: (B, d_in) in its original dtype; params from prepare_mlp_params()."""
    w1_p, b1_p, w2_p, b2_p = params["w1"], params["b1"], params["w2"], params["b2"]
    d_in, d_out = params["d_in"], params["d_out"]
    d_hid_p = w1_p.shape[1]
    d_out_p = w2_p.shape[1]
    batch = x.shape[0]
    assert x.shape[1] == d_in, f"expected (B, {d_in}), got {x.shape}"

    out_dtype = jnp.dtype(out_dtype) if out_dtype is not None else x.dtype
    x_bytes = x.dtype.itemsize
    out_bytes = out_dtype.itemsize

    if tile_b is None:
        tile_b = _pick_tile_b(batch)
    grid_b = pl.cdiv(batch, tile_b)   # partial last tile: OOB rows masked on store

    flops = 2 * batch * (d_in * d_hid_p + d_hid_p * d_out_p)
    bytes_accessed = (x.size * x_bytes + w1_p.size * 2 + w2_p.size * 2
                      + b1_p.size * 4 + b2_p.size * 4 + batch * d_out_p * out_bytes)
    transcendentals = batch * d_hid_p if activation == "gelu" else 0
    cost = pl.CostEstimate(flops=flops, bytes_accessed=bytes_accessed,
                           transcendentals=transcendentals)
    out_shape = jax.ShapeDtypeStruct((batch, d_out_p), out_dtype)

    weight_bytes = (w1_p.size + w2_p.size) * 2
    use_ktiled = force_ktiled or weight_bytes > _vmem_capacity_bytes() // 2

    if not use_ktiled:
        # ---- Path A: weights VMEM-resident, batch streamed -----------------
        kernel = functools.partial(_mlp_kernel_resident, activation=activation)

        def run(single_buffer_weights):
            wmode = ({"pipeline_mode": pl.Buffered(1)}
                     if single_buffer_weights else {})
            weight_buffers = 1 if single_buffer_weights else 2
            return pl.pallas_call(
                kernel,
                out_shape=out_shape,
                grid=(grid_b,),
                in_specs=[
                    pl.BlockSpec((tile_b, d_in), lambda i: (i, 0)),            # streamed
                    pl.BlockSpec((d_in, d_hid_p), lambda i: (0, 0), **wmode),  # resident
                    pl.BlockSpec((1, d_hid_p), lambda i: (0, 0), **wmode),
                    pl.BlockSpec((d_hid_p, d_out_p), lambda i: (0, 0), **wmode),
                    pl.BlockSpec((1, d_out_p), lambda i: (0, 0), **wmode),
                ],
                out_specs=pl.BlockSpec((tile_b, d_out_p), lambda i: (i, 0)),
                compiler_params=pltpu.CompilerParams(
                    dimension_semantics=("parallel",),
                    vmem_limit_bytes=_vmem_limit_resident(
                        tile_b, d_in, d_hid_p, d_out_p, x_bytes, out_bytes,
                        weight_buffers),
                ),
                cost_estimate=cost,
            )(x, w1_p, b1_p, w2_p, b2_p)

        try:
            out_p = run(single_buffer_weights=True)
        except Exception:
            # Fallback if pl.Buffered(1) on invariant specs is rejected by this
            # build; constant index_maps still DMA the weights only once.
            out_p = run(single_buffer_weights=False)
    else:
        # ---- Path B: hidden dim tiled (weights too big for VMEM) -----------
        if tile_h is None:
            tile_h = _pick_tile_h(d_hid_p)
        assert tile_h % _LANE == 0 and d_hid_p % tile_h == 0
        grid_h = d_hid_p // tile_h
        kernel = functools.partial(_mlp_kernel_ktiled, activation=activation)

        def run_ktiled(single_buffer_b2):
            b2mode = ({"pipeline_mode": pl.Buffered(1)}
                      if single_buffer_b2 else {})
            return pl.pallas_call(
                kernel,
                out_shape=out_shape,
                grid=(grid_b, grid_h),
                in_specs=[
                    pl.BlockSpec((tile_b, d_in), lambda i, k: (i, 0)),
                    pl.BlockSpec((d_in, tile_h), lambda i, k: (0, k)),
                    pl.BlockSpec((1, tile_h), lambda i, k: (0, k)),
                    pl.BlockSpec((tile_h, d_out_p), lambda i, k: (k, 0)),
                    pl.BlockSpec((1, d_out_p), lambda i, k: (0, 0), **b2mode),
                ],
                out_specs=pl.BlockSpec((tile_b, d_out_p), lambda i, k: (i, 0)),
                scratch_shapes=[pltpu.VMEM((tile_b, d_out_p), jnp.float32)],
                compiler_params=pltpu.CompilerParams(
                    dimension_semantics=("parallel", "arbitrary"),
                    vmem_limit_bytes=_vmem_limit_ktiled(
                        tile_b, tile_h, d_in, d_out_p, x_bytes, out_bytes),
                ),
                cost_estimate=cost,
            )(x, w1_p, b1_p, w2_p, b2_p)

        try:
            out_p = run_ktiled(single_buffer_b2=True)
        except Exception:
            out_p = run_ktiled(single_buffer_b2=False)

    return out_p[:, :d_out] if d_out_p != d_out else out_p


# --------------------------------------------------------------------------
# Demo / self-test.
# --------------------------------------------------------------------------
def init_linear_params(key, fan_in, fan_out):
    """PyTorch nn.Linear default init: U(-1/sqrt(fan_in), +1/sqrt(fan_in))."""
    k_w, k_b = jax.random.split(key)
    bound = 1.0 / math.sqrt(fan_in)
    w = jax.random.uniform(k_w, (fan_in, fan_out), jnp.float32, -bound, bound)
    b = jax.random.uniform(k_b, (fan_out,), jnp.float32, -bound, bound)
    return w, b


def _reference(x, w1, b1, w2, b2, activation):
    h = x @ w1 + b1
    h = _apply_activation(h, activation)
    return h @ w2 + b2


if __name__ == "__main__":
    key = jax.random.PRNGKey(0)
    k_x, k_fc1, k_fc2, k_x2 = jax.random.split(key, 4)

    # Small shapes consistent with the module: batch=8, in=16, hidden=32, out=8.
    B, D_IN, D_HID, D_OUT = 8, 16, 32, 8
    ACT = "gelu"

    x = jax.random.normal(k_x, (B, D_IN), jnp.float32)
    w1, b1 = init_linear_params(k_fc1, D_IN, D_HID)
    w2, b2 = init_linear_params(k_fc2, D_HID, D_OUT)

    params = prepare_mlp_params(w1, b1, w2, b2)   # one-time weight prep (hoisted)

    out = mlp_forward(x, params, activation=ACT)
    jax.block_until_ready(out)

    ref = _reference(x, w1, b1, w2, b2, ACT)
    assert out.shape == ref.shape, f"shape mismatch {out.shape} vs {ref.shape}"
    # bf16 MXU matmuls (f32 accumulation) => loosened tolerance vs the f32 ref.
    err = float(jnp.max(jnp.abs(out.astype(jnp.float32) - ref)))
    assert jnp.allclose(out.astype(jnp.float32), ref, atol=5e-2, rtol=5e-2), \
        f"resident path mismatch (max abs err {err})"

    # Exercise the hidden-dim-tiled path (auto-selected for large d_hid) on
    # small shapes: 2 k-steps, partial last batch tile, bf16 output.
    B2, D_HID2 = 12, 256
    x2 = jax.random.normal(k_x2, (B2, D_IN), jnp.float32)
    w1b, b1b = init_linear_params(jax.random.PRNGKey(1), D_IN, D_HID2)
    w2b, b2b = init_linear_params(jax.random.PRNGKey(2), D_HID2, D_OUT)
    params2 = prepare_mlp_params(w1b, b1b, w2b, b2b)
    out2 = mlp_forward(x2, params2, activation="relu", out_dtype=jnp.bfloat16,
                       tile_h=128, force_ktiled=True)
    jax.block_until_ready(out2)
    ref2 = _reference(x2, w1b, b1b, w2b, b2b, "relu")
    err2 = float(jnp.max(jnp.abs(out2.astype(jnp.float32) - ref2)))
    assert jnp.allclose(out2.astype(jnp.float32), ref2, atol=5e-2, rtol=5e-2), \
        f"k-tiled path mismatch (max abs err {err2})"

    print("KERNEL_OK")
</pallas_src>

<mosaic_0001>
module attributes {stable_mosaic.version = 11 : i64} {
  func.func @_mlp_kernel_resident(%arg0: i32, %arg1: memref<8x16xf32, #tpu.memory_space<vmem>>, %arg2: memref<16x128xbf16, #tpu.memory_space<vmem>>, %arg3: memref<1x128xf32, #tpu.memory_space<vmem>>, %arg4: memref<128x128xbf16, #tpu.memory_space<vmem>>, %arg5: memref<1x128xf32, #tpu.memory_space<vmem>>, %arg6: memref<8x128xf32, #tpu.memory_space<vmem>>) attributes {dimension_semantics = [#tpu.dimension_semantics<parallel>], iteration_bounds = array<i64: 1>, scalar_prefetch = 0 : i64, scratch_operands = 0 : i64, tpu.core_type = #tpu.core_type<tc>, window_params = [{transform_indices = @transform_0, window_bounds = array<i64: 8, 16>}, {pipeline_mode = #tpu.pipeline_mode<synchronous>, transform_indices = @transform_1, window_bounds = array<i64: 16, 128>}, {pipeline_mode = #tpu.pipeline_mode<synchronous>, transform_indices = @transform_2, window_bounds = array<i64: 1, 128>}, {pipeline_mode = #tpu.pipeline_mode<synchronous>, transform_indices = @transform_3, window_bounds = array<i64: 128, 128>}, {pipeline_mode = #tpu.pipeline_mode<synchronous>, transform_indices = @transform_4, window_bounds = array<i64: 1, 128>}, {transform_indices = @transform_5, window_bounds = array<i64: 8, 128>}]} {
    %c0 = arith.constant 0 : index
    %c0_0 = arith.constant 0 : index
    %0 = vector.load %arg1[%c0, %c0_0] : memref<8x16xf32, #tpu.memory_space<vmem>>, vector<8x16xf32>
    %1 = arith.truncf %0 : vector<8x16xf32> to vector<8x16xbf16>
    %c0_1 = arith.constant 0 : index
    %c0_2 = arith.constant 0 : index
    %2 = vector.load %arg2[%c0_1, %c0_2] : memref<16x128xbf16, #tpu.memory_space<vmem>>, vector<16x128xbf16>
    %cst = arith.constant dense<0.000000e+00> : vector<8x128xf32>
    %3 = tpu.matmul %1, %2, %cst {dimension_numbers = #tpu.dot_dimension_numbers<[1], [0], [0], [1], [0, 0, 1, 1], [], []>} : vector<8x16xbf16>, vector<16x128xbf16>, vector<8x128xf32> -> vector<8x128xf32>
    %c0_3 = arith.constant 0 : index
    %c0_4 = arith.constant 0 : index
    %4 = vector.load %arg3[%c0_3, %c0_4] : memref<1x128xf32, #tpu.memory_space<vmem>>, vector<1x128xf32>
    %5 = vector.broadcast %4 : vector<1x128xf32> to vector<8x128xf32>
    %6 = arith.addf %3, %5 : vector<8x128xf32>
    %cst_5 = arith.constant 5.000000e-01 : f32
    %7 = vector.broadcast %cst_5 : f32 to vector<8x128xf32>
    %8 = arith.mulf %7, %6 : vector<8x128xf32>
    %cst_6 = arith.constant 0.707106769 : f32
    %9 = vector.broadcast %cst_6 : f32 to vector<8x128xf32>
    %10 = arith.mulf %6, %9 : vector<8x128xf32>
    %11 = math.erf %10 : vector<8x128xf32>
    %cst_7 = arith.constant 1.000000e+00 : f32
    %12 = vector.broadcast %cst_7 : f32 to vector<8x128xf32>
    %13 = arith.addf %12, %11 : vector<8x128xf32>
    %14 = arith.mulf %8, %13 : vector<8x128xf32>
    %15 = arith.truncf %14 : vector<8x128xf32> to vector<8x128xbf16>
    %c0_8 = arith.constant 0 : index
    %c0_9 = arith.constant 0 : index
    %16 = vector.load %arg4[%c0_8, %c0_9] : memref<128x128xbf16, #tpu.memory_space<vmem>>, vector<128x128xbf16>
    %cst_10 = arith.constant dense<0.000000e+00> : vector<8x128xf32>
    %17 = tpu.matmul %15, %16, %cst_10 {dimension_numbers = #tpu.dot_dimension_numbers<[1], [0], [0], [1], [0, 0, 1, 1], [], []>} : vector<8x128xbf16>, vector<128x128xbf16>, vector<8x128xf32> -> vector<8x128xf32>
    %c0_11 = arith.constant 0 : index
    %c0_12 = arith.constant 0 : index
    %18 = vector.load %arg5[%c0_11, %c0_12] : memref<1x128xf32, #tpu.memory_space<vmem>>, vector<1x128xf32>
    %19 = vector.broadcast %18 : vector<1x128xf32> to vector<8x128xf32>
    %20 = arith.addf %17, %19 : vector<8x128xf32>
    %c0_13 = arith.constant 0 : index
    %c0_14 = arith.constant 0 : index
    %21 = vector.load %arg6[%c0_13, %c0_14] : memref<8x128xf32, #tpu.memory_space<vmem>>, vector<8x128xf32>
    tpu.vector_store %arg6[%c0_13, %c0_14], %20 {strides = array<i32>} : memref<8x128xf32, #tpu.memory_space<vmem>>, vector<8x128xf32>,
    return
  }
  func.func @transform_0(%arg0: i32) -> (i32, i32) {
    %c0_i32 = arith.constant 0 : i32
    %c0_i32_0 = arith.constant 0 : i32
    return %arg0, %c0_i32 : i32, i32
  }
  func.func @transform_1(%arg0: i32) -> (i32, i32) {
    %c0_i32 = arith.constant 0 : i32
    %c0_i32_0 = arith.constant 0 : i32
    %c0_i32_1 = arith.constant 0 : i32
    return %c0_i32, %c0_i32_0 : i32, i32
  }
  func.func @transform_2(%arg0: i32) -> (i32, i32) {
    %c0_i32 = arith.constant 0 : i32
    %c0_i32_0 = arith.constant 0 : i32
    %c0_i32_1 = arith.constant 0 : i32
    return %c0_i32, %c0_i32_0 : i32, i32
  }
  func.func @transform_3(%arg0: i32) -> (i32, i32) {
    %c0_i32 = arith.constant 0 : i32
    %c0_i32_0 = arith.constant 0 : i32
    %c0_i32_1 = arith.constant 0 : i32
    return %c0_i32, %c0_i32_0 : i32, i32
  }
  func.func @transform_4(%arg0: i32) -> (i32, i32) {
    %c0_i32 = arith.constant 0 : i32
    %c0_i32_0 = arith.constant 0 : i32
    %c0_i32_1 = arith.constant 0 : i32
    return %c0_i32, %c0_i32_0 : i32, i32
  }
  func.func @transform_5(%arg0: i32) -> (i32, i32) {
    %c0_i32 = arith.constant 0 : i32
    %c0_i32_0 = arith.constant 0 : i32
    return %arg0, %c0_i32 : i32, i32
  }
}

module attributes {stable_mosaic.version = 11 : i64} {
  func.func @_mlp_kernel_resident(%arg0: i32, %arg1: memref<8x16xf32, #tpu.memory_space<vmem>>, %arg2: memref<16x128xbf16, #tpu.memory_space<vmem>>, %arg3: memref<1x128xf32, #tpu.memory_space<vmem>>, %arg4: memref<128x128xbf16, #tpu.memory_space<vmem>>, %arg5: memref<1x128xf32, #tpu.memory_space<vmem>>, %arg6: memref<8x128xf32, #tpu.memory_space<vmem>>) attributes {dimension_semantics = [#tpu.dimension_semantics<parallel>], iteration_bounds = array<i64: 1>, scalar_prefetch = 0 : i64, scratch_operands = 0 : i64, tpu.core_type = #tpu.core_type<tc>, window_params = [{transform_indices = @transform_0, window_bounds = array<i64: 8, 16>}, {pipeline_mode = #tpu.pipeline_mode<synchronous>, transform_indices = @transform_1, window_bounds = array<i64: 16, 128>}, {pipeline_mode = #tpu.pipeline_mode<synchronous>, transform_indices = @transform_2, window_bounds = array<i64: 1, 128>}, {pipeline_mode = #tpu.pipeline_mode<synchronous>, transform_indices = @transform_3, window_bounds = array<i64: 128, 128>}, {pipeline_mode = #tpu.pipeline_mode<synchronous>, transform_indices = @transform_4, window_bounds = array<i64: 1, 128>}, {transform_indices = @transform_5, window_bounds = array<i64: 8, 128>}]} {
    %c0 = arith.constant 0 : index
    %c0_0 = arith.constant 0 : index
    %0 = vector.load %arg1[%c0, %c0_0] : memref<8x16xf32, #tpu.memory_space<vmem>>, vector<8x16xf32>
    %1 = arith.truncf %0 : vector<8x16xf32> to vector<8x16xbf16>
    %c0_1 = arith.constant 0 : index
    %c0_2 = arith.constant 0 : index
    %2 = vector.load %arg2[%c0_1, %c0_2] : memref<16x128xbf16, #tpu.memory_space<vmem>>, vector<16x128xbf16>
    %cst = arith.constant dense<0.000000e+00> : vector<8x128xf32>
    %3 = tpu.matmul %1, %2, %cst {dimension_numbers = #tpu.dot_dimension_numbers<[1], [0], [0], [1], [0, 0, 1, 1], [], []>} : vector<8x16xbf16>, vector<16x128xbf16>, vector<8x128xf32> -> vector<8x128xf32>
    %c0_3 = arith.constant 0 : index
    %c0_4 = arith.constant 0 : index
    %4 = vector.load %arg3[%c0_3, %c0_4] : memref<1x128xf32, #tpu.memory_space<vmem>>, vector<1x128xf32>
    %5 = vector.broadcast %4 : vector<1x128xf32> to vector<8x128xf32>
    %6 = arith.addf %3, %5 : vector<8x128xf32>
    %cst_5 = arith.constant 5.000000e-01 : f32
    %7 = vector.broadcast %cst_5 : f32 to vector<8x128xf32>
    %8 = arith.mulf %7, %6 : vector<8x128xf32>
    %cst_6 = arith.constant 0.707106769 : f32
    %9 = vector.broadcast %cst_6 : f32 to vector<8x128xf32>
    %10 = arith.mulf %6, %9 : vector<8x128xf32>
    %11 = math.erf %10 : vector<8x128xf32>
    %cst_7 = arith.constant 1.000000e+00 : f32
    %12 = vector.broadcast %cst_7 : f32 to vector<8x128xf32>
    %13 = arith.addf %12, %11 : vector<8x128xf32>
    %14 = arith.mulf %8, %13 : vector<8x128xf32>
    %15 = arith.truncf %14 : vector<8x128xf32> to vector<8x128xbf16>
    %c0_8 = arith.constant 0 : index
    %c0_9 = arith.constant 0 : index
    %16 = vector.load %arg4[%c0_8, %c0_9] : memref<128x128xbf16, #tpu.memory_space<vmem>>, vector<128x128xbf16>
    %cst_10 = arith.constant dense<0.000000e+00> : vector<8x128xf32>
    %17 = tpu.matmul %15, %16, %cst_10 {dimension_numbers = #tpu.dot_dimension_numbers<[1], [0], [0], [1], [0, 0, 1, 1], [], []>} : vector<8x128xbf16>, vector<128x128xbf16>, vector<8x128xf32> -> vector<8x128xf32>
    %c0_11 = arith.constant 0 : index
    %c0_12 = arith.constant 0 : index
    %18 = vector.load %arg5[%c0_11, %c0_12] : memref<1x128xf32, #tpu.memory_space<vmem>>, vector<1x128xf32>
    %19 = vector.broadcast %18 : vector<1x128xf32> to vector<8x128xf32>
    %20 = arith.addf %17, %19 : vector<8x128xf32>
    %c0_13 = arith.constant 0 : index
    %c0_14 = arith.constant 0 : index
    %21 = vector.load %arg6[%c0_13, %c0_14] : memref<8x128xf32, #tpu.memory_space<vmem>>, vector<8x128xf32>
    tpu.vector_store %arg6[%c0_13, %c0_14], %20 {strides = array<i32>} : memref<8x128xf32, #tpu.memory_space<vmem>>, vector<8x128xf32>,
    return
  }
  func.func @transform_0(%arg0: i32) -> (i32, i32) {
    %c0_i32 = arith.constant 0 : i32
    %c0_i32_0 = arith.constant 0 : i32
    return %arg0, %c0_i32 : i32, i32
  }
  func.func @transform_1(%arg0: i32) -> (i32, i32) {
    %c0_i32 = arith.constant 0 : i32
    %c0_i32_0 = arith.constant 0 : i32
    %c0_i32_1 = arith.constant 0 : i32
    return %c0_i32, %c0_i32_0 : i32, i32
  }
  func.func @transform_2(%arg0: i32) -> (i32, i32) {
    %c0_i32 = arith.constant 0 : i32
    %c0_i32_0 = arith.constant 0 : i32
    %c0_i32_1 = arith.constant 0 : i32
    return %c0_i32, %c0_i32_0 : i32, i32
  }
  func.func @transform_3(%arg0: i32) -> (i32, i32) {
    %c0_i32 = arith.constant 0 : i32
    %c0_i32_0 = arith.constant 0 : i32
    %c0_i32_1 = arith.constant 0 : i32
    return %c0_i32, %c0_i32_0 : i32, i32
  }
  func.func @transform_4(%arg0: i32) -> (i32, i32) {
    %c0_i32 = arith.constant 0 : i32
    %c0_i32_0 = arith.constant 0 : i32
    %c0_i32_1 = arith.constant 0 : i32
    return %c0_i32, %c0_i32_0 : i32, i32
  }
  func.func @transform_5(%arg0: i32) -> (i32, i32) {
    %c0_i32 = arith.constant 0 : i32
    %c0_i32_0 = arith.constant 0 : i32
    return %arg0, %c0_i32 : i32, i32
  }
}

</mosaic_0001>

<llo_original>
// kernel: tpu_custom_call.1
$region0: #{tpu_custom_call.1}
  #allocation0 [shape = 'u32[]', space=smem, size = 0x4, offset = 0x4, fixed_abs, tag = 'smem constant byte address 0x4 - core index']
  #allocation1 [shape = 'u32[72,128]{1,0:T(1,128)}', space=vmem, size = 0x9000, scoped, tag = 'internal scratch']
  %s0 = inlined_call_operand.hbm [shape: f32[8,16], index: 0, kind: input, shape index: {}]
  %s1 = inlined_call_operand.hbm [shape: bf16[16,128], index: 1, kind: input, shape index: {}]
  %s2 = inlined_call_operand.vmem [shape: f32[1,128], index: 2, kind: input, shape index: {}]
  %s3 = inlined_call_operand.hbm [shape: bf16[128,128], index: 3, kind: input, shape index: {}]
  %s4 = inlined_call_operand.vmem [shape: f32[1,128], index: 4, kind: input, shape index: {}]
  %s5 = inlined_call_operand.hbm [shape: f32[8,128], index: 5, kind: output, shape index: {}]
  %s6 = sld [smem:[#allocation0]]
  $region42: #{tpu_custom_call.1} parent=0
    _
  %s8 = ssub.s32 1, %s6
  %s9 = scalar_select 0, %s8, %s6
  $region1: #{tpu_custom_call.1} parent=0
    #allocation2 [shape = 'u8[4096]{0}', space=vmem, size = 0x1000, scoped, tag = 'input window, operand 0, single buffered']
    #allocation3 [shape = 's32[1]{0}', space=sflag, size = 0x4, scoped, tag = 'scoped memory for tpu_custom_call.1']
    #allocation4 [shape = 's32[1]{0}', space=sflag, size = 0x4, scoped, tag = 'scoped memory for tpu_custom_call.1']
    #allocation5 [shape = 'u8[4096]{0}', space=vmem, size = 0x1000, scoped, tag = 'input window, operand 1, single buffered']
    #allocation6 [shape = 's32[1]{0}', space=sflag, size = 0x4, scoped, tag = 'scoped memory for tpu_custom_call.1']
    #allocation7 [shape = 'u8[32768]{0}', space=vmem, size = 0x8000, scoped, tag = 'input window, operand 3, single buffered']
    #allocation8 [shape = 'u8[4096]{0}', space=vmem, size = 0x1000, scoped, tag = 'output window, operand 0, single buffered']
    %10 = vsyncpa [#allocation3], 0
    %11 = vsyncpa [#allocation6], 0
    %12 = vsyncpa [#allocation4], 0
    // Predicated region
    $region2: #{tpu_custom_call.1} parent=1 // pred_check
      _
    $region3: #{tpu_custom_call.1} parent=1 // pred_check_branch
      %14 = sbr.rel (0) target = $region5
    $region4: #{tpu_custom_call.1} parent=1 // pred_region
      %16 = vsyncadd [#allocation3], 0
      %s18 = sshll.u32 %s0, 4
      %s19 = int_to_ptr.hbm [resolvable:$true] %s18
      %s20 = sshll.u32 [#allocation2], 4
      %s21 = int_to_ptr.vmem [resolvable:$true] %s20
      %23 = dma.hbm_to_vmem [thread:$0]  %s19, 128, %s21, [#allocation3]
    $region5: #{tpu_custom_call.1} parent=1 // pred_fallthru
      _
    // Predicated region
    $region6: #{tpu_custom_call.1} parent=1 // pred_check
      _
    $region7: #{tpu_custom_call.1} parent=1 // pred_check_branch
      %25 = sbr.rel (0) target = $region9
    $region8: #{tpu_custom_call.1} parent=1 // pred_region
      %27 = vsyncadd [#allocation6], 0
      %s28 = sshll.u32 %s1, 4
      %s29 = int_to_ptr.hbm [resolvable:$true] %s28
      %s30 = sshll.u32 [#allocation5], 4
      %s31 = int_to_ptr.vmem [resolvable:$true] %s30
      %36 = dma.hbm_to_vmem [thread:$0]  %s29, 128, %s31, [#allocation6], 64, 64, 4
    $region9: #{tpu_custom_call.1} parent=1 // pred_fallthru
      _
    // Predicated region
    $region10: #{tpu_custom_call.1} parent=1 // pred_check
      _
    $region11: #{tpu_custom_call.1} parent=1 // pred_check_branch
      %38 = sbr.rel (0) target = $region13
    $region12: #{tpu_custom_call.1} parent=1 // pred_region
      _
    $region13: #{tpu_custom_call.1} parent=1 // pred_fallthru
      _
    // Predicated region
    $region14: #{tpu_custom_call.1} parent=1 // pred_check
      _
    $region15: #{tpu_custom_call.1} parent=1 // pred_check_branch
      %40 = sbr.rel (0) target = $region17
    $region16: #{tpu_custom_call.1} parent=1 // pred_region
      %42 = vsyncadd [#allocation6], 0
      %s43 = sshll.u32 %s3, 4
      %s44 = int_to_ptr.hbm [resolvable:$true] %s43
      %s45 = sshll.u32 [#allocation7], 4
      %s46 = int_to_ptr.vmem [resolvable:$true] %s45
      %51 = dma.hbm_to_vmem [thread:$0]  %s44, 1024, %s46, [#allocation6], 64, 64, 4
    $region17: #{tpu_custom_call.1} parent=1 // pred_fallthru
      _
    // Predicated region
    $region18: #{tpu_custom_call.1} parent=1 // pred_check
      _
    $region19: #{tpu_custom_call.1} parent=1 // pred_check_branch
      %53 = sbr.rel (0) target = $region21
    $region20: #{tpu_custom_call.1} parent=1 // pred_region
      _
    $region21: #{tpu_custom_call.1} parent=1 // pred_fallthru
      _
    // Predicated region
    $region22: #{tpu_custom_call.1} parent=1 // pred_check
      _
    $region23: #{tpu_custom_call.1} parent=1 // pred_check_branch
      %55 = sbr.rel (0) target = $region25
    $region24: #{tpu_custom_call.1} parent=1 // pred_region
      %57 = dma.done [#allocation3], 128
    $region25: #{tpu_custom_call.1} parent=1 // pred_fallthru
      _
    // Predicated region
    $region26: #{tpu_custom_call.1} parent=1 // pred_check
      _
    $region27: #{tpu_custom_call.1} parent=1 // pred_check_branch
      %59 = sbr.rel (0) target = $region29
    $region28: #{tpu_custom_call.1} parent=1 // pred_region
      %61 = dma.done [#allocation6], 128
    $region29: #{tpu_custom_call.1} parent=1 // pred_fallthru
      _
    // Predicated region
    $region30: #{tpu_custom_call.1} parent=1 // pred_check
      _
    $region31: #{tpu_custom_call.1} parent=1 // pred_check_branch
      %63 = sbr.rel (0) target = $region33
    $region32: #{tpu_custom_call.1} parent=1 // pred_region
      %65 = dma.done [#allocation6], 1024
    $region33: #{tpu_custom_call.1} parent=1 // pred_fallthru
      _
    %v67 = vld [vmem:[#allocation2] sm:$0xff]
    %v68 = vpack.c.bf16 %v67, %v67
    %v69 = vld [vmem:[#allocation5] sm:$0xf]
    %v70 = vld [vmem:[#allocation5 + $0x4] sm:$0xf]
    %v71 = vld [vmem:[%s2] sm:$0x1]
    %v73 = vperm.slane %v71, 0
    %v77 = vunpack.c.l.b16 %v69
    %v78 = vunpack.c.l.b16 %v70
    %v79 = vpack.c.b16 %v78, %v77
    %vm81 = vcmask 130048
    %v83 = vsel %vm81, %v68, 0
    %85 = vmatpush.bf16.msra.mxu0 0
    %86 = vmatpush.bf16.msra.mxu0 0
    %87 = vmatpush.bf16.msra.mxu0 0
    %88 = vmatpush.bf16.msra.mxu0 0
    %89 = vmatpush.bf16.msra.mxu0 0
    %90 = vmatpush.bf16.msra.mxu0 0
    %91 = vmatpush.bf16.msra.mxu0 0
    %92 = vmatpush.bf16.msra.mxu0 %v79
    %93 = vmatmul.bf16.gmra.mxu0 %v83
    %v94 = vpop.f32.mrf.mxu0
    %v95 = vadd.f32 %v73, %v94
    %v96 = vpop.f32.mrf.mxu0
    %97 = vdwg.mxu0
    %v98 = vmul.f32 %v95, 0.5
    %v99 = vmul.f32 %v95, 0.70710677
    %v100 = vmul.f32 %v99, %v99
    %v101 = vmin.f32 16.0, %v100
    %v102 = vmul.f32 %v101, 2.1237322e-06
    %v103 = vadd.f32 %v102, 0.00028619796
    %v104 = vmul.f32 %v101, %v103
    %v105 = vadd.f32 %v104, 0.0036580483
    %v106 = vmul.f32 %v101, %v105
    %v107 = vadd.f32 %v106, 0.05243302
    %v108 = vmul.f32 %v101, %v107
    %v109 = vadd.f32 %v108, 0.18741608
    %v110 = vmul.f32 %v101, %v109
    %v111 = vadd.f32 %v110, 1.1283791
    %v112 = vmul.f32 %v99, %v111
    %v113 = vmul.f32 %v101, 3.8918573e-05
    %v114 = vadd.f32 %v113, 0.001143296
    %v115 = vmul.f32 %v101, %v114
    %v116 = vadd.f32 %v115, 0.014752088
    %v117 = vmul.f32 %v101, %v116
    %v118 = vadd.f32 %v117, 0.112945676
    %v119 = vmul.f32 %v101, %v118
    %v120 = vadd.f32 %v119, 0.4994258
    %v121 = vmul.f32 %v101, %v120
    %v122 = vadd.f32 %v121, 1.0
    %v123 = vrcp.pop %v122
    %v124 = vmul.f32 %v122, %v123
    %v125 = vsub.f32 1.0, %v124
    %v126 = vmul.f32 %v123, %v125
    %v127 = vadd.f32 %v123, %v126
    %vm128 = vweird.f32 %v122
    %vm129 = vweird.f32 %v123
    %vm130 = vmor %vm128, %vm129
    %v131 = vsel %vm130, %v123, %v127
    %v132 = vand.u32 2147483647, %v122
    %vm133 = vcmp.eq.f32.partialorder %v132, 8.507059e+37
    %v134 = vand.u32 %v122, 2147483648
    %v135 = vor.u32 1.1754944e-38, %v134
    %v136 = vsel %vm133, %v135, %v131
    %v137 = vmul.f32 %v112, %v136
    %v138 = vmin.f32 %v137, 1.0
    %v139 = vmax.f32 %v138, -1.0
    %v140 = vadd.f32 %v139, 1.0
    %v141 = vmul.f32 %v98, %v140
    %v142 = vpack.c.bf16 %v141, %v141
    %v143 = vld [vmem:[#allocation7] sm:$0xf]
    %v144 = vld [vmem:[#allocation7 + $0x4] sm:$0xf]
    %v145 = vld [vmem:[#allocation7 + $0x8] sm:$0xf]
    %v146 = vld [vmem:[#allocation7 + $0xc] sm:$0xf]
    %v147 = vld [vmem:[#allocation7 + $0x10] sm:$0xf]
    %v148 = vld [vmem:[#allocation7 + $0x14] sm:$0xf]
    %v149 = vld [vmem:[#allocation7 + $0x18] sm:$0xf]
    %v150 = vld [vmem:[#allocation7 + $0x1c] sm:$0xf]
    %v151 = vld [vmem:[#allocation7 + $0x20] sm:$0xf]
    %v152 = vld [vmem:[#allocation7 + $0x24] sm:$0xf]
    %v153 = vld [vmem:[#allocation7 + $0x28] sm:$0xf]
    %v154 = vld [vmem:[#allocation7 + $0x2c] sm:$0xf]
    %v155 = vld [vmem:[#allocation7 + $0x30] sm:$0xf]
    %v156 = vld [vmem:[#allocation7 + $0x34] sm:$0xf]
    %v157 = vld [vmem:[#allocation7 + $0x38] sm:$0xf]
    %v158 = vld [vmem:[#allocation7 + $0x3c] sm:$0xf]
    %v159 = vld [vmem:[%s4] sm:$0x1]
    %v161 = vperm.slane %v159, 0
    %v179 = vunpack.c.l.b16 %v143
    %v180 = vunpack.c.l.b16 %v144
    %v181 = vunpack.c.l.b16 %v145
    %v182 = vunpack.c.l.b16 %v146
    %v183 = vunpack.c.l.b16 %v147
    %v184 = vunpack.c.l.b16 %v148
    %v185 = vunpack.c.l.b16 %v149
    %v186 = vunpack.c.l.b16 %v150
    %v187 = vunpack.c.l.b16 %v151
    %v188 = vunpack.c.l.b16 %v152
    %v189 = vunpack.c.l.b16 %v153
    %v190 = vunpack.c.l.b16 %v154
    %v191 = vunpack.c.l.b16 %v155
    %v192 = vunpack.c.l.b16 %v156
    %v193 = vunpack.c.l.b16 %v157
    %v194 = vunpack.c.l.b16 %v158
    %v195 = vpack.c.b16 %v180, %v179
    %v196 = vpack.c.b16 %v182, %v181
    %v197 = vpack.c.b16 %v184, %v183
    %v198 = vpack.c.b16 %v186, %v185
    %v199 = vpack.c.b16 %v188, %v187
    %v200 = vpack.c.b16 %v190, %v189
    %v201 = vpack.c.b16 %v192, %v191
    %v202 = vpack.c.b16 %v194, %v193
    %211 = vmatpush.bf16.msra.mxu0 %v202
    %212 = vmatpush.bf16.msra.mxu0 %v201
    %213 = vmatpush.bf16.msra.mxu0 %v200
    %214 = vmatpush.bf16.msra.mxu0 %v199
    %215 = vmatpush.bf16.msra.mxu0 %v198
    %216 = vmatpush.bf16.msra.mxu0 %v197
    %217 = vmatpush.bf16.msra.mxu0 %v196
    %218 = vmatpush.bf16.msra.mxu0 %v195
    %219 = vmatmul.bf16.gmra.mxu0 %v142
    %v220 = vpop.f32.mrf.mxu0
    %v221 = vadd.f32 %v161, %v220
    %v222 = vpop.f32.mrf.mxu0
    %223 = vdwg.mxu0
    %224 = vst [vmem:[#allocation8] sm:$0xff] %v221
    // Predicated region
    $region34: #{tpu_custom_call.1} parent=1 // pred_check
      _
    $region35: #{tpu_custom_call.1} parent=1 // pred_check_branch
      %226 = sbr.rel (0) target = $region37
    $region36: #{tpu_custom_call.1} parent=1 // pred_region
      %228 = vsyncadd [#allocation4], 0
      %s230 = sshll.u32 [#allocation8], 4
      %s231 = int_to_ptr.vmem [resolvable:$true] %s230
      %s232 = sshll.u32 %s5, 4
      %s233 = int_to_ptr.hbm [resolvable:$true] %s232
      %235 = dma.vmem_to_hbm [thread:$0]  %s231, 128, %s233, [#allocation4]
    $region37: #{tpu_custom_call.1} parent=1 // pred_fallthru
      _
    // Predicated region
    $region38: #{tpu_custom_call.1} parent=1 // pred_check
      _
    $region39: #{tpu_custom_call.1} parent=1 // pred_check_branch
      %237 = sbr.rel (0) target = $region41
    $region40: #{tpu_custom_call.1} parent=1 // pred_region
      %239 = dma.done [#allocation4], 128
    $region41: #{tpu_custom_call.1} parent=1 // pred_fallthru
      _
    %240 = vsyncpa [#allocation3], 1
    %241 = vsyncpa [#allocation6], 1
    %242 = vsyncpa [#allocation4], 1

// kernel: tpu_custom_call.1
$region0: #{tpu_custom_call.1}
  #allocation0 [shape = 'u32[]', space=smem, size = 0x4, offset = 0x4, fixed_abs, tag = 'smem constant byte address 0x4 - core index']
  #allocation1 [shape = 'u32[72,128]{1,0:T(1,128)}', space=vmem, size = 0x9000, scoped, tag = 'internal scratch']
  %s0 = inlined_call_operand.hbm [shape: f32[8,16], index: 0, kind: input, shape index: {}]
  %s1 = inlined_call_operand.hbm [shape: bf16[16,128], index: 1, kind: input, shape index: {}]
  %s2 = inlined_call_operand.vmem [shape: f32[1,128], index: 2, kind: input, shape index: {}]
  %s3 = inlined_call_operand.hbm [shape: bf16[128,128], index: 3, kind: input, shape index: {}]
  %s4 = inlined_call_operand.vmem [shape: f32[1,128], index: 4, kind: input, shape index: {}]
  %s5 = inlined_call_operand.hbm [shape: f32[8,128], index: 5, kind: output, shape index: {}]
  %s6 = sld [smem:[#allocation0]]
  $region42: #{tpu_custom_call.1} parent=0
    _
  %s8 = ssub.s32 1, %s6
  %s9 = scalar_select 0, %s8, %s6
  $region1: #{tpu_custom_call.1} parent=0
    #allocation2 [shape = 'u8[4096]{0}', space=vmem, size = 0x1000, scoped, tag = 'input window, operand 0, single buffered']
    #allocation3 [shape = 's32[1]{0}', space=sflag, size = 0x4, scoped, tag = 'scoped memory for tpu_custom_call.1']
    #allocation4 [shape = 's32[1]{0}', space=sflag, size = 0x4, scoped, tag = 'scoped memory for tpu_custom_call.1']
    #allocation5 [shape = 'u8[4096]{0}', space=vmem, size = 0x1000, scoped, tag = 'input window, operand 1, single buffered']
    #allocation6 [shape = 's32[1]{0}', space=sflag, size = 0x4, scoped, tag = 'scoped memory for tpu_custom_call.1']
    #allocation7 [shape = 'u8[32768]{0}', space=vmem, size = 0x8000, scoped, tag = 'input window, operand 3, single buffered']
    #allocation8 [shape = 'u8[4096]{0}', space=vmem, size = 0x1000, scoped, tag = 'output window, operand 0, single buffered']
    %10 = vsyncpa [#allocation3], 0
    %11 = vsyncpa [#allocation6], 0
    %12 = vsyncpa [#allocation4], 0
    // Predicated region
    $region2: #{tpu_custom_call.1} parent=1 // pred_check
      _
    $region3: #{tpu_custom_call.1} parent=1 // pred_check_branch
      %14 = sbr.rel (0) target = $region5
    $region4: #{tpu_custom_call.1} parent=1 // pred_region
      %16 = vsyncadd [#allocation3], 0
      %s18 = sshll.u32 %s0, 4
      %s19 = int_to_ptr.hbm [resolvable:$true] %s18
      %s20 = sshll.u32 [#allocation2], 4
      %s21 = int_to_ptr.vmem [resolvable:$true] %s20
      %23 = dma.hbm_to_vmem [thread:$0]  %s19, 128, %s21, [#allocation3]
    $region5: #{tpu_custom_call.1} parent=1 // pred_fallthru
      _
    // Predicated region
    $region6: #{tpu_custom_call.1} parent=1 // pred_check
      _
    $region7: #{tpu_custom_call.1} parent=1 // pred_check_branch
      %25 = sbr.rel (0) target = $region9
    $region8: #{tpu_custom_call.1} parent=1 // pred_region
      %27 = vsyncadd [#allocation6], 0
      %s28 = sshll.u32 %s1, 4
      %s29 = int_to_ptr.hbm [resolvable:$true] %s28
      %s30 = sshll.u32 [#allocation5], 4
      %s31 = int_to_ptr.vmem [resolvable:$true] %s30
      %36 = dma.hbm_to_vmem [thread:$0]  %s29, 128, %s31, [#allocation6], 64, 64, 4
    $region9: #{tpu_custom_call.1} parent=1 // pred_fallthru
      _
    // Predicated region
    $region10: #{tpu_custom_call.1} parent=1 // pred_check
      _
    $region11: #{tpu_custom_call.1} parent=1 // pred_check_branch
      %38 = sbr.rel (0) target = $region13
    $region12: #{tpu_custom_call.1} parent=1 // pred_region
      _
    $region13: #{tpu_custom_call.1} parent=1 // pred_fallthru
      _
    // Predicated region
    $region14: #{tpu_custom_call.1} parent=1 // pred_check
      _
    $region15: #{tpu_custom_call.1} parent=1 // pred_check_branch
      %40 = sbr.rel (0) target = $region17
    $region16: #{tpu_custom_call.1} parent=1 // pred_region
      %42 = vsyncadd [#allocation6], 0
      %s43 = sshll.u32 %s3, 4
      %s44 = int_to_ptr.hbm [resolvable:$true] %s43
      %s45 = sshll.u32 [#allocation7], 4
      %s46 = int_to_ptr.vmem [resolvable:$true] %s45
      %51 = dma.hbm_to_vmem [thread:$0]  %s44, 1024, %s46, [#allocation6], 64, 64, 4
    $region17: #{tpu_custom_call.1} parent=1 // pred_fallthru
      _
    // Predicated region
    $region18: #{tpu_custom_call.1} parent=1 // pred_check
      _
    $region19: #{tpu_custom_call.1} parent=1 // pred_check_branch
      %53 = sbr.rel (0) target = $region21
    $region20: #{tpu_custom_call.1} parent=1 // pred_region
      _
    $region21: #{tpu_custom_call.1} parent=1 // pred_fallthru
      _
    // Predicated region
    $region22: #{tpu_custom_call.1} parent=1 // pred_check
      _
    $region23: #{tpu_custom_call.1} parent=1 // pred_check_branch
      %55 = sbr.rel (0) target = $region25
    $region24: #{tpu_custom_call.1} parent=1 // pred_region
      %57 = dma.done [#allocation3], 128
    $region25: #{tpu_custom_call.1} parent=1 // pred_fallthru
      _
    // Predicated region
    $region26: #{tpu_custom_call.1} parent=1 // pred_check
      _
    $region27: #{tpu_custom_call.1} parent=1 // pred_check_branch
      %59 = sbr.rel (0) target = $region29
    $region28: #{tpu_custom_call.1} parent=1 // pred_region
      %61 = dma.done [#allocation6], 128
    $region29: #{tpu_custom_call.1} parent=1 // pred_fallthru
      _
    // Predicated region
    $region30: #{tpu_custom_call.1} parent=1 // pred_check
      _
    $region31: #{tpu_custom_call.1} parent=1 // pred_check_branch
      %63 = sbr.rel (0) target = $region33
    $region32: #{tpu_custom_call.1} parent=1 // pred_region
      %65 = dma.done [#allocation6], 1024
    $region33: #{tpu_custom_call.1} parent=1 // pred_fallthru
      _
    %v67 = vld [vmem:[#allocation2] sm:$0xff]
    %v68 = vpack.c.bf16 %v67, %v67
    %v69 = vld [vmem:[#allocation5] sm:$0xf]
    %v70 = vld [vmem:[#allocation5 + $0x4] sm:$0xf]
    %v71 = vld [vmem:[%s2] sm:$0x1]
    %v73 = vperm.slane %v71, 0
    %v77 = vunpack.c.l.b16 %v69
    %v78 = vunpack.c.l.b16 %v70
    %v79 = vpack.c.b16 %v78, %v77
    %vm81 = vcmask 130048
    %v83 = vsel %vm81, %v68, 0
    %85 = vmatpush.bf16.msra.mxu0 0
    %86 = vmatpush.bf16.msra.mxu0 0
    %87 = vmatpush.bf16.msra.mxu0 0
    %88 = vmatpush.bf16.msra.mxu0 0
    %89 = vmatpush.bf16.msra.mxu0 0
    %90 = vmatpush.bf16.msra.mxu0 0
    %91 = vmatpush.bf16.msra.mxu0 0
    %92 = vmatpush.bf16.msra.mxu0 %v79
    %93 = vmatmul.bf16.gmra.mxu0 %v83
    %v94 = vpop.f32.mrf.mxu0
    %v95 = vadd.f32 %v73, %v94
    %v96 = vpop.f32.mrf.mxu0
    %97 = vdwg.mxu0
    %v98 = vmul.f32 %v95, 0.5
    %v99 = vmul.f32 %v95, 0.70710677
    %v100 = vmul.f32 %v99, %v99
    %v101 = vmin.f32 16.0, %v100
    %v102 = vmul.f32 %v101, 2.1237322e-06
    %v103 = vadd.f32 %v102, 0.00028619796
    %v104 = vmul.f32 %v101, %v103
    %v105 = vadd.f32 %v104, 0.0036580483
    %v106 = vmul.f32 %v101, %v105
    %v107 = vadd.f32 %v106, 0.05243302
    %v108 = vmul.f32 %v101, %v107
    %v109 = vadd.f32 %v108, 0.18741608
    %v110 = vmul.f32 %v101, %v109
    %v111 = vadd.f32 %v110, 1.1283791
    %v112 = vmul.f32 %v99, %v111
    %v113 = vmul.f32 %v101, 3.8918573e-05
    %v114 = vadd.f32 %v113, 0.001143296
    %v115 = vmul.f32 %v101, %v114
    %v116 = vadd.f32 %v115, 0.014752088
    %v117 = vmul.f32 %v101, %v116
    %v118 = vadd.f32 %v117, 0.112945676
    %v119 = vmul.f32 %v101, %v118
    %v120 = vadd.f32 %v119, 0.4994258
    %v121 = vmul.f32 %v101, %v120
    %v122 = vadd.f32 %v121, 1.0
    %v123 = vrcp.pop %v122
    %v124 = vmul.f32 %v122, %v123
    %v125 = vsub.f32 1.0, %v124
    %v126 = vmul.f32 %v123, %v125
    %v127 = vadd.f32 %v123, %v126
    %vm128 = vweird.f32 %v122
    %vm129 = vweird.f32 %v123
    %vm130 = vmor %vm128, %vm129
    %v131 = vsel %vm130, %v123, %v127
    %v132 = vand.u32 2147483647, %v122
    %vm133 = vcmp.eq.f32.partialorder %v132, 8.507059e+37
    %v134 = vand.u32 %v122, 2147483648
    %v135 = vor.u32 1.1754944e-38, %v134
    %v136 = vsel %vm133, %v135, %v131
    %v137 = vmul.f32 %v112, %v136
    %v138 = vmin.f32 %v137, 1.0
    %v139 = vmax.f32 %v138, -1.0
    %v140 = vadd.f32 %v139, 1.0
    %v141 = vmul.f32 %v98, %v140
    %v142 = vpack.c.bf16 %v141, %v141
    %v143 = vld [vmem:[#allocation7] sm:$0xf]
    %v144 = vld [vmem:[#allocation7 + $0x4] sm:$0xf]
    %v145 = vld [vmem:[#allocation7 + $0x8] sm:$0xf]
    %v146 = vld [vmem:[#allocation7 + $0xc] sm:$0xf]
    %v147 = vld [vmem:[#allocation7 + $0x10] sm:$0xf]
    %v148 = vld [vmem:[#allocation7 + $0x14] sm:$0xf]
    %v149 = vld [vmem:[#allocation7 + $0x18] sm:$0xf]
    %v150 = vld [vmem:[#allocation7 + $0x1c] sm:$0xf]
    %v151 = vld [vmem:[#allocation7 + $0x20] sm:$0xf]
    %v152 = vld [vmem:[#allocation7 + $0x24] sm:$0xf]
    %v153 = vld [vmem:[#allocation7 + $0x28] sm:$0xf]
    %v154 = vld [vmem:[#allocation7 + $0x2c] sm:$0xf]
    %v155 = vld [vmem:[#allocation7 + $0x30] sm:$0xf]
    %v156 = vld [vmem:[#allocation7 + $0x34] sm:$0xf]
    %v157 = vld [vmem:[#allocation7 + $0x38] sm:$0xf]
    %v158 = vld [vmem:[#allocation7 + $0x3c] sm:$0xf]
    %v159 = vld [vmem:[%s4] sm:$0x1]
    %v161 = vperm.slane %v159, 0
    %v179 = vunpack.c.l.b16 %v143
    %v180 = vunpack.c.l.b16 %v144
    %v181 = vunpack.c.l.b16 %v145
    %v182 = vunpack.c.l.b16 %v146
    %v183 = vunpack.c.l.b16 %v147
    %v184 = vunpack.c.l.b16 %v148
    %v185 = vunpack.c.l.b16 %v149
    %v186 = vunpack.c.l.b16 %v150
    %v187 = vunpack.c.l.b16 %v151
    %v188 = vunpack.c.l.b16 %v152
    %v189 = vunpack.c.l.b16 %v153
    %v190 = vunpack.c.l.b16 %v154
    %v191 = vunpack.c.l.b16 %v155
    %v192 = vunpack.c.l.b16 %v156
    %v193 = vunpack.c.l.b16 %v157
    %v194 = vunpack.c.l.b16 %v158
    %v195 = vpack.c.b16 %v180, %v179
    %v196 = vpack.c.b16 %v182, %v181
    %v197 = vpack.c.b16 %v184, %v183
    %v198 = vpack.c.b16 %v186, %v185
    %v199 = vpack.c.b16 %v188, %v187
    %v200 = vpack.c.b16 %v190, %v189
    %v201 = vpack.c.b16 %v192, %v191
    %v202 = vpack.c.b16 %v194, %v193
    %211 = vmatpush.bf16.msra.mxu0 %v202
    %212 = vmatpush.bf16.msra.mxu0 %v201
    %213 = vmatpush.bf16.msra.mxu0 %v200
    %214 = vmatpush.bf16.msra.mxu0 %v199
    %215 = vmatpush.bf16.msra.mxu0 %v198
    %216 = vmatpush.bf16.msra.mxu0 %v197
    %217 = vmatpush.bf16.msra.mxu0 %v196
    %218 = vmatpush.bf16.msra.mxu0 %v195
    %219 = vmatmul.bf16.gmra.mxu0 %v142
    %v220 = vpop.f32.mrf.mxu0
    %v221 = vadd.f32 %v161, %v220
    %v222 = vpop.f32.mrf.mxu0
    %223 = vdwg.mxu0
    %224 = vst [vmem:[#allocation8] sm:$0xff] %v221
    // Predicated region
    $region34: #{tpu_custom_call.1} parent=1 // pred_check
      _
    $region35: #{tpu_custom_call.1} parent=1 // pred_check_branch
      %226 = sbr.rel (0) target = $region37
    $region36: #{tpu_custom_call.1} parent=1 // pred_region
      %228 = vsyncadd [#allocation4], 0
      %s230 = sshll.u32 [#allocation8], 4
      %s231 = int_to_ptr.vmem [resolvable:$true] %s230
      %s232 = sshll.u32 %s5, 4
      %s233 = int_to_ptr.hbm [resolvable:$true] %s232
      %235 = dma.vmem_to_hbm [thread:$0]  %s231, 128, %s233, [#allocation4]
    $region37: #{tpu_custom_call.1} parent=1 // pred_fallthru
      _
    // Predicated region
    $region38: #{tpu_custom_call.1} parent=1 // pred_check
      _
    $region39: #{tpu_custom_call.1} parent=1 // pred_check_branch
      %237 = sbr.rel (0) target = $region41
    $region40: #{tpu_custom_call.1} parent=1 // pred_region
      %239 = dma.done [#allocation4], 128
    $region41: #{tpu_custom_call.1} parent=1 // pred_fallthru
      _
    %240 = vsyncpa [#allocation3], 1
    %241 = vsyncpa [#allocation6], 1
    %242 = vsyncpa [#allocation4], 1

</llo_original>
